<compile_context>
chip_gen: v7x
topology: tpu7x:2x2x1
jax: 0.10.0
libtpu: 0.0.40
codegen_flags: <defaults>
</compile_context>

<pallas_src>
import functools

import jax
import jax.numpy as jnp
from jax.experimental import pallas as pl
from jax.experimental.pallas import tpu as pltpu

HIDDEN = 64
_LANE = 128        # lane width (last-dim tiling)
_SUBLANE = 8       # f32 sublane width
_BF16_SUBLANE = 16  # bf16 sublane packing


def _round_up(x, m):
    return (x + m - 1) // m * m


def _mlp_kernel(x_ref, w1_ref, b1_ref, w2_ref, b2_ref, w3_ref, b3_ref, o_ref):
    """One batch tile: out = relu(relu(x@W1+b1)@W2+b2)@W3+b3.

    x arrives f32 / unpadded-K; the bf16 cast is VPU work hidden under the
    obs DMA. Matmuls accumulate f32 on the MXU; output stored bf16.
    """
    x = x_ref[...].astype(w1_ref.dtype)                                   # [tm, in_p] bf16
    h1 = jnp.dot(x, w1_ref[...], preferred_element_type=jnp.float32)      # [tm, hid_p] f32
    h1 = jnp.maximum(h1 + b1_ref[...], 0.0)
    h2 = jnp.dot(h1.astype(w2_ref.dtype), w2_ref[...],
                 preferred_element_type=jnp.float32)                      # [tm, hid_p] f32
    h2 = jnp.maximum(h2 + b2_ref[...], 0.0)
    out = jnp.dot(h2.astype(w3_ref.dtype), w3_ref[...],
                  preferred_element_type=jnp.float32)                     # [tm, out_p] f32
    o_ref[...] = (out + b3_ref[...]).astype(o_ref.dtype)                  # bf16 store


def prepare_params(params, *, compute_dtype=jnp.bfloat16):
    """One-time weight prep: pad hidden/out dims to 128 lanes, cast to bf16.

    Call once and reuse — this keeps the pad/convert XLA ops out of the
    per-step forward pass.
    """
    w1, b1 = params["w1"], params["b1"]
    w2, b2 = params["w2"], params["b2"]
    w3, b3 = params["w3"], params["b3"]
    in_dim, hidden = w1.shape
    out_dim = w3.shape[1]

    in_p = _round_up(in_dim, _SUBLANE)   # contraction dim only needs sublane alignment
    hid_p = _round_up(hidden, _LANE)
    out_p = _round_up(out_dim, _LANE)

    pad2 = lambda a, r, c: jnp.pad(a, ((0, r - a.shape[0]), (0, c - a.shape[1])))
    f32 = jnp.float32
    return {
        "w1": pad2(w1, in_p, hid_p).astype(compute_dtype),
        "b1": pad2(b1, 1, hid_p).astype(f32),
        "w2": pad2(w2, hid_p, hid_p).astype(compute_dtype),
        "b2": pad2(b2, 1, hid_p).astype(f32),
        "w3": pad2(w3, hid_p, out_p).astype(compute_dtype),
        "b3": pad2(b3, 1, out_p).astype(f32),
    }


def feed_forward_actor(obs, prepared, *, out_dim, tile_m=1024, slice_output=True):
    """obs: [batch, in_dim] float32. prepared: output of prepare_params().

    Returns [batch, out_dim] float32 (or the raw [batch, 128] bf16 slab if
    slice_output=False, letting the consumer fuse the slice/upcast).
    """
    w1_p, b1_p = prepared["w1"], prepared["b1"]
    w2_p, b2_p = prepared["w2"], prepared["b2"]
    w3_p, b3_p = prepared["w3"], prepared["b3"]

    batch, in_dim = obs.shape
    in_p = w1_p.shape[0]
    out_p = w3_p.shape[1]

    # Only needed when in_dim is not a multiple of 8 (no-op otherwise).
    if in_dim != in_p:
        obs = jnp.pad(obs, ((0, 0), (0, in_p - in_dim)))

    # Batch tile: multiple of 16 (bf16 sublane packing), big default so the
    # kernel isn't per-grid-step-overhead bound, capped so grid_m >= 2 when
    # the batch is big enough for v7x's two TensorCores to both get work.
    if batch >= 2 * _BF16_SUBLANE:
        tm = min(tile_m, _round_up(-(-batch // 2), _BF16_SUBLANE))
    else:
        tm = _round_up(max(batch, 1), _BF16_SUBLANE)
    grid_m = -(-batch // tm)

    # Weights/biases: constant index_map -> DMA'd once, VMEM-resident across
    # the whole batch grid.
    const = lambda a: pl.BlockSpec(a.shape, lambda i: (0, 0))

    out_padded = pl.pallas_call(
        _mlp_kernel,
        out_shape=jax.ShapeDtypeStruct((batch, out_p), jnp.bfloat16),
        grid=(grid_m,),
        in_specs=[
            pl.BlockSpec((tm, in_p), lambda i: (i, 0)),   # obs streamed per tile (f32)
            const(w1_p), const(b1_p),
            const(w2_p), const(b2_p),
            const(w3_p), const(b3_p),
        ],
        out_specs=pl.BlockSpec((tm, out_p), lambda i: (i, 0)),
        compiler_params=pltpu.CompilerParams(
            dimension_semantics=("parallel",)),   # batch tiles shard across v7x's 2 TCs
    )(obs, w1_p, b1_p, w2_p, b2_p, w3_p, b3_p)

    if not slice_output:
        return out_padded
    return out_padded[:, :out_dim].astype(jnp.float32)


def init_params(key, in_dim, out_dim):
    """Deterministic init mimicking torch.nn.Linear's U(-1/sqrt(fan_in), +)."""
    def linear(k, fan_in, fan_out):
        kw, kb = jax.random.split(k)
        bound = 1.0 / jnp.sqrt(float(fan_in))
        w = jax.random.uniform(kw, (fan_in, fan_out), jnp.float32, -bound, bound)
        b = jax.random.uniform(kb, (1, fan_out), jnp.float32, -bound, bound)
        return w, b

    k1, k2, k3 = jax.random.split(key, 3)
    w1, b1 = linear(k1, in_dim, HIDDEN)
    w2, b2 = linear(k2, HIDDEN, HIDDEN)
    w3, b3 = linear(k3, HIDDEN, out_dim)
    return {"w1": w1, "b1": b1, "w2": w2, "b2": b2, "w3": w3, "b3": b3}


def _reference_f32(obs, p):
    h1 = jnp.maximum(obs @ p["w1"] + p["b1"], 0.0)
    h2 = jnp.maximum(h1 @ p["w2"] + p["b2"], 0.0)
    return h2 @ p["w3"] + p["b3"]


def _reference_bf16(obs, p):
    """Same math as the kernel: bf16 matmul inputs, f32 accumulation."""
    bf = jnp.bfloat16
    dot = lambda a, b: jnp.dot(a.astype(bf), b.astype(bf),
                               preferred_element_type=jnp.float32)
    h1 = jnp.maximum(dot(obs, p["w1"]) + p["b1"], 0.0)
    h2 = jnp.maximum(dot(h1, p["w2"]) + p["b2"], 0.0)
    return dot(h2, p["w3"]) + p["b3"]


if __name__ == "__main__":
    key = jax.random.PRNGKey(0)
    k_obs, k_par = jax.random.split(key)

    # Small, deliberately unaligned shapes: batch 40 -> tm=32 -> 2 tiles
    # (exercises the multi-tile grid and the masked ragged last tile).
    batch, in_dim, out_dim = 40, 24, 6
    obs = jax.random.normal(k_obs, (batch, in_dim), jnp.float32)
    params = init_params(k_par, in_dim, out_dim)

    prepared = prepare_params(params)   # one-time weight prep, reused every call
    fwd = jax.jit(functools.partial(feed_forward_actor, out_dim=out_dim))
    out = jax.block_until_ready(fwd(obs, prepared))

    assert out.shape == (batch, out_dim)
    # Tight check against a bf16-matmul / f32-accumulate reference, rounded to
    # bf16 like the kernel's output store.
    ref_bf16 = _reference_bf16(obs, params).astype(jnp.bfloat16).astype(jnp.float32)
    assert jnp.allclose(out, ref_bf16, atol=2e-2, rtol=2e-2)
    # Loose check against the full-f32 torch-equivalent reference.
    ref_f32 = _reference_f32(obs, params)
    assert jnp.allclose(out, ref_f32, atol=7e-2, rtol=7e-2)

    print("KERNEL_OK")
</pallas_src>

<mosaic_0001>
module attributes {stable_mosaic.version = 11 : i64} {
  func.func @_mlp_kernel(%arg0: i32, %arg1: memref<32x24xf32, #tpu.memory_space<vmem>>, %arg2: memref<24x128xbf16, #tpu.memory_space<vmem>>, %arg3: memref<1x128xf32, #tpu.memory_space<vmem>>, %arg4: memref<128x128xbf16, #tpu.memory_space<vmem>>, %arg5: memref<1x128xf32, #tpu.memory_space<vmem>>, %arg6: memref<128x128xbf16, #tpu.memory_space<vmem>>, %arg7: memref<1x128xf32, #tpu.memory_space<vmem>>, %arg8: memref<32x128xbf16, #tpu.memory_space<vmem>>) attributes {dimension_semantics = [#tpu.dimension_semantics<parallel>], iteration_bounds = array<i64: 2>, scalar_prefetch = 0 : i64, scratch_operands = 0 : i64, tpu.core_type = #tpu.core_type<tc>, window_params = [{transform_indices = @transform_0, window_bounds = array<i64: 32, 24>}, {pipeline_mode = #tpu.pipeline_mode<synchronous>, transform_indices = @transform_1, window_bounds = array<i64: 24, 128>}, {pipeline_mode = #tpu.pipeline_mode<synchronous>, transform_indices = @transform_2, window_bounds = array<i64: 1, 128>}, {pipeline_mode = #tpu.pipeline_mode<synchronous>, transform_indices = @transform_3, window_bounds = array<i64: 128, 128>}, {pipeline_mode = #tpu.pipeline_mode<synchronous>, transform_indices = @transform_4, window_bounds = array<i64: 1, 128>}, {pipeline_mode = #tpu.pipeline_mode<synchronous>, transform_indices = @transform_5, window_bounds = array<i64: 128, 128>}, {pipeline_mode = #tpu.pipeline_mode<synchronous>, transform_indices = @transform_6, window_bounds = array<i64: 1, 128>}, {transform_indices = @transform_7, window_bounds = array<i64: 32, 128>}]} {
    %c0 = arith.constant 0 : index
    %c0_0 = arith.constant 0 : index
    %0 = vector.load %arg1[%c0, %c0_0] : memref<32x24xf32, #tpu.memory_space<vmem>>, vector<32x24xf32>
    %1 = arith.truncf %0 : vector<32x24xf32> to vector<32x24xbf16>
    %c0_1 = arith.constant 0 : index
    %c0_2 = arith.constant 0 : index
    %2 = vector.load %arg2[%c0_1, %c0_2] : memref<24x128xbf16, #tpu.memory_space<vmem>>, vector<24x128xbf16>
    %cst = arith.constant dense<0.000000e+00> : vector<32x128xf32>
    %3 = tpu.matmul %1, %2, %cst {dimension_numbers = #tpu.dot_dimension_numbers<[1], [0], [0], [1], [0, 0, 1, 1], [], []>} : vector<32x24xbf16>, vector<24x128xbf16>, vector<32x128xf32> -> vector<32x128xf32>
    %c0_3 = arith.constant 0 : index
    %c0_4 = arith.constant 0 : index
    %4 = vector.load %arg3[%c0_3, %c0_4] : memref<1x128xf32, #tpu.memory_space<vmem>>, vector<1x128xf32>
    %5 = vector.broadcast %4 : vector<1x128xf32> to vector<32x128xf32>
    %6 = arith.addf %3, %5 : vector<32x128xf32>
    %cst_5 = arith.constant 0.000000e+00 : f32
    %7 = vector.broadcast %cst_5 : f32 to vector<32x128xf32>
    %8 = arith.maximumf %6, %7 : vector<32x128xf32>
    %9 = arith.truncf %8 : vector<32x128xf32> to vector<32x128xbf16>
    %c0_6 = arith.constant 0 : index
    %c0_7 = arith.constant 0 : index
    %10 = vector.load %arg4[%c0_6, %c0_7] : memref<128x128xbf16, #tpu.memory_space<vmem>>, vector<128x128xbf16>
    %cst_8 = arith.constant dense<0.000000e+00> : vector<32x128xf32>
    %11 = tpu.matmul %9, %10, %cst_8 {dimension_numbers = #tpu.dot_dimension_numbers<[1], [0], [0], [1], [0, 0, 1, 1], [], []>} : vector<32x128xbf16>, vector<128x128xbf16>, vector<32x128xf32> -> vector<32x128xf32>
    %c0_9 = arith.constant 0 : index
    %c0_10 = arith.constant 0 : index
    %12 = vector.load %arg5[%c0_9, %c0_10] : memref<1x128xf32, #tpu.memory_space<vmem>>, vector<1x128xf32>
    %13 = vector.broadcast %12 : vector<1x128xf32> to vector<32x128xf32>
    %14 = arith.addf %11, %13 : vector<32x128xf32>
    %cst_11 = arith.constant 0.000000e+00 : f32
    %15 = vector.broadcast %cst_11 : f32 to vector<32x128xf32>
    %16 = arith.maximumf %14, %15 : vector<32x128xf32>
    %17 = arith.truncf %16 : vector<32x128xf32> to vector<32x128xbf16>
    %c0_12 = arith.constant 0 : index
    %c0_13 = arith.constant 0 : index
    %18 = vector.load %arg6[%c0_12, %c0_13] : memref<128x128xbf16, #tpu.memory_space<vmem>>, vector<128x128xbf16>
    %cst_14 = arith.constant dense<0.000000e+00> : vector<32x128xf32>
    %19 = tpu.matmul %17, %18, %cst_14 {dimension_numbers = #tpu.dot_dimension_numbers<[1], [0], [0], [1], [0, 0, 1, 1], [], []>} : vector<32x128xbf16>, vector<128x128xbf16>, vector<32x128xf32> -> vector<32x128xf32>
    %c0_15 = arith.constant 0 : index
    %c0_16 = arith.constant 0 : index
    %20 = vector.load %arg7[%c0_15, %c0_16] : memref<1x128xf32, #tpu.memory_space<vmem>>, vector<1x128xf32>
    %21 = vector.broadcast %20 : vector<1x128xf32> to vector<32x128xf32>
    %22 = arith.addf %19, %21 : vector<32x128xf32>
    %23 = arith.truncf %22 : vector<32x128xf32> to vector<32x128xbf16>
    %c0_17 = arith.constant 0 : index
    %c0_18 = arith.constant 0 : index
    %24 = vector.load %arg8[%c0_17, %c0_18] : memref<32x128xbf16, #tpu.memory_space<vmem>>, vector<32x128xbf16>
    tpu.vector_store %arg8[%c0_17, %c0_18], %23 {strides = array<i32>} : memref<32x128xbf16, #tpu.memory_space<vmem>>, vector<32x128xbf16>,
    return
  }
  func.func @transform_0(%arg0: i32) -> (i32, i32) {
    %c0_i32 = arith.constant 0 : i32
    %c0_i32_0 = arith.constant 0 : i32
    return %arg0, %c0_i32 : i32, i32
  }
  func.func @transform_1(%arg0: i32) -> (i32, i32) {
    %c0_i32 = arith.constant 0 : i32
    %c0_i32_0 = arith.constant 0 : i32
    %c0_i32_1 = arith.constant 0 : i32
    return %c0_i32, %c0_i32_0 : i32, i32
  }
  func.func @transform_2(%arg0: i32) -> (i32, i32) {
    %c0_i32 = arith.constant 0 : i32
    %c0_i32_0 = arith.constant 0 : i32
    %c0_i32_1 = arith.constant 0 : i32
    return %c0_i32, %c0_i32_0 : i32, i32
  }
  func.func @transform_3(%arg0: i32) -> (i32, i32) {
    %c0_i32 = arith.constant 0 : i32
    %c0_i32_0 = arith.constant 0 : i32
    %c0_i32_1 = arith.constant 0 : i32
    return %c0_i32, %c0_i32_0 : i32, i32
  }
  func.func @transform_4(%arg0: i32) -> (i32, i32) {
    %c0_i32 = arith.constant 0 : i32
    %c0_i32_0 = arith.constant 0 : i32
    %c0_i32_1 = arith.constant 0 : i32
    return %c0_i32, %c0_i32_0 : i32, i32
  }
  func.func @transform_5(%arg0: i32) -> (i32, i32) {
    %c0_i32 = arith.constant 0 : i32
    %c0_i32_0 = arith.constant 0 : i32
    %c0_i32_1 = arith.constant 0 : i32
    return %c0_i32, %c0_i32_0 : i32, i32
  }
  func.func @transform_6(%arg0: i32) -> (i32, i32) {
    %c0_i32 = arith.constant 0 : i32
    %c0_i32_0 = arith.constant 0 : i32
    %c0_i32_1 = arith.constant 0 : i32
    return %c0_i32, %c0_i32_0 : i32, i32
  }
  func.func @transform_7(%arg0: i32) -> (i32, i32) {
    %c0_i32 = arith.constant 0 : i32
    %c0_i32_0 = arith.constant 0 : i32
    return %arg0, %c0_i32 : i32, i32
  }
}

</mosaic_0001>

<llo_original>
// kernel: feed_forward_actor.1
$region0: #{feed_forward_actor.1}
  #allocation0 [shape = 'u32[]', space=smem, size = 0x4, offset = 0x4, fixed_abs, tag = 'smem constant byte address 0x4 - core index']
  #allocation1 [shape = 'u32[144,128]{1,0:T(1,128)}', space=vmem, size = 0x12000, scoped, tag = 'internal scratch']
  %s0 = inlined_call_operand.vmem [shape: f32[40,24], index: 0, kind: input, shape index: {}]
  %s1 = inlined_call_operand.vmem [shape: bf16[24,128], index: 1, kind: input, shape index: {}]
  %s2 = inlined_call_operand.vmem [shape: f32[1,128], index: 2, kind: input, shape index: {}]
  %s3 = inlined_call_operand.vmem [shape: bf16[128,128], index: 3, kind: input, shape index: {}]
  %s4 = inlined_call_operand.vmem [shape: f32[1,128], index: 4, kind: input, shape index: {}]
  %s5 = inlined_call_operand.hbm [shape: bf16[128,128], index: 5, kind: input, shape index: {}]
  %s6 = inlined_call_operand.vmem [shape: f32[1,128], index: 6, kind: input, shape index: {}]
  %s7 = inlined_call_operand.vmem [shape: bf16[40,128], index: 7, kind: output, shape index: {}]
  %s8 = sld [smem:[#allocation0]]
  $region109: #{feed_forward_actor.1} parent=0
    _
  %s10 = ssub.s32 1, %s8
  %s11 = scalar_select 0, %s10, %s8
  $region1: #{feed_forward_actor.1} parent=0
    #allocation2 [shape = 'u8[32768]{0}', space=vmem, size = 0x8000, scoped, tag = 'input window, operand 5, single buffered']
    #allocation3 [shape = 's32[2]{0}', space=sflag, size = 0x8, scoped, tag = 'scoped memory for feed_forward_actor.1']
    #allocation4 [shape = 'u8[16384]{0}', space=vmem, size = 0x4000, scoped, tag = 'output window, operand 0']
    %12 = vsyncpa [#allocation3], 0
    loop: start=0, step=1, limit=4
    $region2: #{feed_forward_actor.1} parent=1 // loop_pre_header
      _
    $region3: #{feed_forward_actor.1} parent=1 // loop_header
      %s14 = sphi 0, %s18
      %p15 = scmp.ge.s32.totalorder %s14, 4
      %s24 = sphi 0, %s26
      %s27 = sphi 0, %s24
      %s28 = sphi 0, %s27
      %s44 = sphi 0, %s28
      %s48 = sphi 0, %s48
      %s50 = sphi 0, %s48
      %s51 = sphi 0, %s50
      %s65 = sphi 0, %s51
      %s69 = sphi 0, %s69
      %s71 = sphi 0, %s69
      %s72 = sphi 0, %s71
      %s86 = sphi 0, %s72
      %s90 = sphi 0, %s90
      %s92 = sphi 0, %s90
      %s93 = sphi 0, %s92
      %s107 = sphi 0, %s93
      %s111 = sphi 0, %s111
      %s113 = sphi 0, %s111
      %s114 = sphi 0, %s113
      %s128 = sphi 0, %s114
      %s132 = sphi 0, %s132
      %s134 = sphi 0, %s132
      %s135 = sphi 0, %s134
      %s149 = sphi 0, %s135
      %s153 = sphi 0, %s153
      %s155 = sphi 0, %s153
      %s156 = sphi 0, %s155
      %s170 = sphi 0, %s156
      %s176 = sphi 0, %s178
      %s179 = sphi 0, %s176
      %s180 = sphi 0, %s179
      %s196 = sphi 0, %s180
    $region4: #{feed_forward_actor.1} parent=1 // loop_header_branch
      %17 = sbr.rel (%p15) target = $region8
    $region5: #{feed_forward_actor.1} parent=1 // loop_body
      %s19 = ssub.s32 %s14, 1
      %s20 = ssub.s32 %s14, 2
      %s21 = sadd.s32 %s14, 1
      %s22 = ssub.s32 %s14, %s21
      %p23 = scmp.eq.s32.totalorder %s22, 0
      %s25 = sadd.s32 %s24, 1
      %s26 = scalar_select %p23, %s24, %s25
      %p29 = pneg %p23
      %p30 = scmp.eq.s32.totalorder %s14, 1
      %p31 = por %p29, %p30
      %p32 = scmp.ne.s32.totalorder %s24, %s27
      %p33 = scmp.eq.s32.totalorder %s14, 0
      %p34 = por %p32, %p33
      %p35 = scmp.ne.s32.totalorder %s24, %s27
      %p36 = scmp.eq.s32.totalorder %s19, 1
      %p37 = por %p35, %p36
      %p38 = scmp.ne.s32.totalorder %s27, %s28
      %p39 = scmp.eq.s32.totalorder %s19, 0
      %p40 = por %p38, %p39
      %p41 = scmp.ne.s32.totalorder %s27, %s28
      %p42 = scmp.eq.s32.totalorder %s20, 1
      %p43 = por %p41, %p42
      %p45 = scmp.ne.s32.totalorder %s28, %s44
      %p46 = scmp.eq.s32.totalorder %s20, 0
      %p47 = por %p45, %p46
      %s49 = sadd.s32 %s48, 1
      %p52 = scmp.eq.s32.totalorder %s14, 1
      %p53 = scmp.ne.s32.totalorder %s48, %s50
      %p54 = scmp.eq.s32.totalorder %s14, 0
      %p55 = por %p53, %p54
      %p56 = scmp.ne.s32.totalorder %s48, %s50
      %p57 = scmp.eq.s32.totalorder %s19, 1
      %p58 = por %p56, %p57
      %p59 = scmp.ne.s32.totalorder %s50, %s51
      %p60 = scmp.eq.s32.totalorder %s19, 0
      %p61 = por %p59, %p60
      %p62 = scmp.ne.s32.totalorder %s50, %s51
      %p63 = scmp.eq.s32.totalorder %s20, 1
      %p64 = por %p62, %p63
      %p66 = scmp.ne.s32.totalorder %s51, %s65
      %p67 = scmp.eq.s32.totalorder %s20, 0
      %p68 = por %p66, %p67
      %s70 = sadd.s32 %s69, 1
      %p73 = scmp.eq.s32.totalorder %s14, 1
      %p74 = scmp.ne.s32.totalorder %s69, %s71
      %p75 = scmp.eq.s32.totalorder %s14, 0
      %p76 = por %p74, %p75
      %p77 = scmp.ne.s32.totalorder %s69, %s71
      %p78 = scmp.eq.s32.totalorder %s19, 1
      %p79 = por %p77, %p78
      %p80 = scmp.ne.s32.totalorder %s71, %s72
      %p81 = scmp.eq.s32.totalorder %s19, 0
      %p82 = por %p80, %p81
      %p83 = scmp.ne.s32.totalorder %s71, %s72
      %p84 = scmp.eq.s32.totalorder %s20, 1
      %p85 = por %p83, %p84
      %p87 = scmp.ne.s32.totalorder %s72, %s86
      %p88 = scmp.eq.s32.totalorder %s20, 0
      %p89 = por %p87, %p88
      %s91 = sadd.s32 %s90, 1
      %p94 = scmp.eq.s32.totalorder %s14, 1
      %p95 = scmp.ne.s32.totalorder %s90, %s92
      %p96 = scmp.eq.s32.totalorder %s14, 0
      %p97 = por %p95, %p96
      %p98 = scmp.ne.s32.totalorder %s90, %s92
      %p99 = scmp.eq.s32.totalorder %s19, 1
      %p100 = por %p98, %p99
      %p101 = scmp.ne.s32.totalorder %s92, %s93
      %p102 = scmp.eq.s32.totalorder %s19, 0
      %p103 = por %p101, %p102
      %p104 = scmp.ne.s32.totalorder %s92, %s93
      %p105 = scmp.eq.s32.totalorder %s20, 1
      %p106 = por %p104, %p105
      %p108 = scmp.ne.s32.totalorder %s93, %s107
      %p109 = scmp.eq.s32.totalorder %s20, 0
      %p110 = por %p108, %p109
      %s112 = sadd.s32 %s111, 1
      %p115 = scmp.eq.s32.totalorder %s14, 1
      %p116 = scmp.ne.s32.totalorder %s111, %s113
      %p117 = scmp.eq.s32.totalorder %s14, 0
      %p118 = por %p116, %p117
      %p119 = scmp.ne.s32.totalorder %s111, %s113
      %p120 = scmp.eq.s32.totalorder %s19, 1
      %p121 = por %p119, %p120
      %p122 = scmp.ne.s32.totalorder %s113, %s114
      %p123 = scmp.eq.s32.totalorder %s19, 0
      %p124 = por %p122, %p123
      %p125 = scmp.ne.s32.totalorder %s113, %s114
      %p126 = scmp.eq.s32.totalorder %s20, 1
      %p127 = por %p125, %p126
      %p129 = scmp.ne.s32.totalorder %s114, %s128
      %p130 = scmp.eq.s32.totalorder %s20, 0
      %p131 = por %p129, %p130
      %s133 = sadd.s32 %s132, 1
      %p136 = scmp.eq.s32.totalorder %s14, 1
      %p137 = scmp.ne.s32.totalorder %s132, %s134
      %p138 = scmp.eq.s32.totalorder %s14, 0
      %p139 = por %p137, %p138
      %p140 = scmp.ne.s32.totalorder %s132, %s134
      %p141 = scmp.eq.s32.totalorder %s19, 1
      %p142 = por %p140, %p141
      %p143 = scmp.ne.s32.totalorder %s134, %s135
      %p144 = scmp.eq.s32.totalorder %s19, 0
      %p145 = por %p143, %p144
      %p146 = scmp.ne.s32.totalorder %s134, %s135
      %p147 = scmp.eq.s32.totalorder %s20, 1
      %p148 = por %p146, %p147
      %p150 = scmp.ne.s32.totalorder %s135, %s149
      %p151 = scmp.eq.s32.totalorder %s20, 0
      %p152 = por %p150, %p151
      %s154 = sadd.s32 %s153, 1
      %p157 = scmp.eq.s32.totalorder %s14, 1
      %p158 = scmp.ne.s32.totalorder %s153, %s155
      %p159 = scmp.eq.s32.totalorder %s14, 0
      %p160 = por %p158, %p159
      %p161 = scmp.ne.s32.totalorder %s153, %s155
      %p162 = scmp.eq.s32.totalorder %s19, 1
      %p163 = por %p161, %p162
      %p164 = scmp.ne.s32.totalorder %s155, %s156
      %p165 = scmp.eq.s32.totalorder %s19, 0
      %p166 = por %p164, %p165
      %p167 = scmp.ne.s32.totalorder %s155, %s156
      %p168 = scmp.eq.s32.totalorder %s20, 1
      %p169 = por %p167, %p168
      %p171 = scmp.ne.s32.totalorder %s156, %s170
      %p172 = scmp.eq.s32.totalorder %s20, 0
      %p173 = por %p171, %p172
      %s174 = ssub.s32 %s14, %s21
      %p175 = scmp.eq.s32.totalorder %s174, 0
      %s177 = sadd.s32 %s176, 1
      %s178 = scalar_select %p175, %s176, %s177
      %p181 = pneg %p175
      %p182 = scmp.eq.s32.totalorder %s14, 1
      %p183 = por %p181, %p182
      %p184 = scmp.ne.s32.totalorder %s176, %s179
      %p185 = scmp.eq.s32.totalorder %s14, 0
      %p186 = por %p184, %p185
      %p187 = scmp.ne.s32.totalorder %s176, %s179
      %p188 = scmp.eq.s32.totalorder %s19, 1
      %p189 = por %p187, %p188
      %p190 = scmp.ne.s32.totalorder %s179, %s180
      %p191 = scmp.eq.s32.totalorder %s19, 0
      %p192 = por %p190, %p191
      %p193 = scmp.ne.s32.totalorder %s179, %s180
      %p194 = scmp.eq.s32.totalorder %s20, 1
      %p195 = por %p193, %p194
      %p197 = scmp.ne.s32.totalorder %s180, %s196
      %p198 = scmp.eq.s32.totalorder %s20, 0
      %p199 = por %p197, %p198
      %p200 = scmp.le.s32.totalorder 1, %s14
      %p201 = scmp.lt.s32.totalorder %s14, 3
      %p202 = pnand %p200, %p201
      %p203 = pneg %p202
      // Predicated region
      $region9: #{feed_forward_actor.1} parent=5 // pred_check
        _
      $region10: #{feed_forward_actor.1} parent=5 // pred_check_branch
        %205 = sbr.rel (%p202) target = $region12
      $region11: #{feed_forward_actor.1} parent=5 // pred_region
        %s206 = ssub.s32 %s14, 1
        // Predicated region
        $region13: #{feed_forward_actor.1} parent=11 // pred_check
          %p207 = pneg %p61
        $region14: #{feed_forward_actor.1} parent=11 // pred_check_branch
          %209 = sbr.rel (%p207) target = $region16
        $region15: #{feed_forward_actor.1} parent=11 // pred_region
          _
        $region16: #{feed_forward_actor.1} parent=11 // pred_fallthru
          _
        // Predicated region
        $region17: #{feed_forward_actor.1} parent=11 // pred_check
          %p210 = pneg %p82
        $region18: #{feed_forward_actor.1} parent=11 // pred_check_branch
          %212 = sbr.rel (%p210) target = $region20
        $region19: #{feed_forward_actor.1} parent=11 // pred_region
          _
        $region20: #{feed_forward_actor.1} parent=11 // pred_fallthru
          _
        // Predicated region
        $region21: #{feed_forward_actor.1} parent=11 // pred_check
          %p213 = pneg %p103
        $region22: #{feed_forward_actor.1} parent=11 // pred_check_branch
          %215 = sbr.rel (%p213) target = $region24
        $region23: #{feed_forward_actor.1} parent=11 // pred_region
          _
        $region24: #{feed_forward_actor.1} parent=11 // pred_fallthru
          _
        // Predicated region
        $region25: #{feed_forward_actor.1} parent=11 // pred_check
          %p216 = pneg %p124
        $region26: #{feed_forward_actor.1} parent=11 // pred_check_branch
          %218 = sbr.rel (%p216) target = $region28
        $region27: #{feed_forward_actor.1} parent=11 // pred_region
          _
        $region28: #{feed_forward_actor.1} parent=11 // pred_fallthru
          _
        // Predicated region
        $region29: #{feed_forward_actor.1} parent=11 // pred_check
          %p219 = pneg %p145
        $region30: #{feed_forward_actor.1} parent=11 // pred_check_branch
          %221 = sbr.rel (%p219) target = $region32
        $region31: #{feed_forward_actor.1} parent=11 // pred_region
          %s223 = ssub.s32 1024, 1024
          %224 = vsyncadd [#allocation3], %s223
          %s225 = sshll.u32 [#allocation2], 4
          %s226 = int_to_ptr.vmem [resolvable:$true] %s225
          %231 = dma.hbm_to_vmem [thread:$0]  %s5, 1024, %s226, [#allocation3], 64, 64, 4
        $region32: #{feed_forward_actor.1} parent=11 // pred_fallthru
          _
        // Predicated region
        $region33: #{feed_forward_actor.1} parent=11 // pred_check
          %p232 = pneg %p166
        $region34: #{feed_forward_actor.1} parent=11 // pred_check_branch
          %234 = sbr.rel (%p232) target = $region36
        $region35: #{feed_forward_actor.1} parent=11 // pred_region
          _
        $region36: #{feed_forward_actor.1} parent=11 // pred_fallthru
          _
      $region12: #{feed_forward_actor.1} parent=5 // pred_fallthru
        _
      %p235 = scmp.lt.s32.totalorder %s14, 2
      // Predicated region
      $region37: #{feed_forward_actor.1} parent=5 // pred_check
        %p236 = pneg %p235
      $region38: #{feed_forward_actor.1} parent=5 // pred_check_branch
        %238 = sbr.rel (%p236) target = $region40
      $region39: #{feed_forward_actor.1} parent=5 // pred_region
        // Predicated region
        $region41: #{feed_forward_actor.1} parent=39 // pred_check
          %p239 = pneg %p34
        $region42: #{feed_forward_actor.1} parent=39 // pred_check_branch
          %241 = sbr.rel (%p239) target = $region44
        $region43: #{feed_forward_actor.1} parent=39 // pred_region
          %s242 = smul.u32 4, %s14
          %s243 = ssub.s32 5, %s242
          %p244 = scmp.lt.s32.totalorder %s243, 4
          %s245 = scalar_select %p244, %s243, 4
          %s246 = smul.u32 128, %s245
          %p247 = scmp.lt.s32.totalorder %s242, 4
          %s248 = scalar_select %p247, %s242, 4
          %s249 = smul.addr %s248, 8
          %s250 = scalar_lea.vmem %s0, %s249
          %s251 = smul.u32 4, %s14
          %s252 = ssub.s32 5, %s251
          %p253 = scmp.lt.s32.totalorder %s252, 4
          %s254 = scalar_select %p253, %s252, 4
          %s255 = smul.u32 128, %s254
        $region44: #{feed_forward_actor.1} parent=39 // pred_fallthru
          _
      $region40: #{feed_forward_actor.1} parent=5 // pred_fallthru
        _
      %p256 = scmp.le.s32.totalorder 1, %s14
      %p257 = scmp.lt.s32.totalorder %s14, 3
      %p258 = pnand %p256, %p257
      %p259 = pneg %p258
      // Predicated region
      $region45: #{feed_forward_actor.1} parent=5 // pred_check
        _
      $region46: #{feed_forward_actor.1} parent=5 // pred_check_branch
        %261 = sbr.rel (%p258) target = $region48
      $region47: #{feed_forward_actor.1} parent=5 // pred_region
        %s262 = ssub.s32 %s14, 1
        // Predicated region
        $region49: #{feed_forward_actor.1} parent=47 // pred_check
          %p263 = pneg %p145
        $region50: #{feed_forward_actor.1} parent=47 // pred_check_branch
          %265 = sbr.rel (%p263) target = $region52
        $region51: #{feed_forward_actor.1} parent=47 // pred_region
          %266 = dma.done [#allocation3], 1024
        $region52: #{feed_forward_actor.1} parent=47 // pred_fallthru
          _
        %s267 = smul.u32 4, %s19
        %s268 = ssub.s32 5, %s267
        %p269 = scmp.lt.s32.totalorder %s268, 4
        %s270 = scalar_select %p269, %s268, 4
        %s271 = smul.u32 128, %s270
        %p272 = scmp.lt.s32.totalorder %s267, 4
        %s273 = scalar_select %p272, %s267, 4
        %s274 = smul.addr %s273, 8
        %s275 = scalar_lea.vmem %s0, %s274
        %p276 = pneg %p40
        %p277 = pneg %p37
        %p278 = pneg %p61
        %p279 = pneg %p58
        %p280 = pneg %p82
        %p281 = pneg %p79
        %p282 = pneg %p103
        %p283 = pneg %p100
        %p284 = pneg %p124
        %p285 = pneg %p121
        %p286 = pneg %p145
        %p287 = pneg %p142
        %p288 = pneg %p166
        %p289 = pneg %p163
        %p290 = pneg %p192
        %p291 = pneg %p189
        %s292 = sand.u32 %s179, 1
        %s293 = sand.u32 %s179, 1
        %s294 = smul.addr %s293, 16
        %s295 = scalar_lea.vmem [#allocation4], %s294
        %s296 = smul.u32 4, %s19
        %s297 = ssub.s32 5, %s296
        %p298 = scmp.lt.s32.totalorder %s297, 4
        %s299 = scalar_select %p298, %s297, 4
        %s300 = smul.u32 128, %s299
        %p301 = scmp.lt.s32.totalorder %s296, 4
        %s302 = scalar_select %p301, %s296, 4
        %s303 = smul.addr %s302, 8
        %s304 = scalar_lea.vmem %s0, %s303
        %s305 = smul.u32 4, %s19
        %s306 = ssub.s32 5, %s305
        %p307 = scmp.lt.s32.totalorder %s306, 4
        %s308 = scalar_select %p307, %s306, 4
        %s309 = smul.u32 128, %s308
        %s310 = smul.u32 4, %s19
        %s311 = ssub.s32 5, %s310
        %p312 = scmp.lt.s32.totalorder %s311, 4
        %s313 = scalar_select %p312, %s311, 4
        %s314 = smul.u32 64, %s313
        %v316 = vld [vmem:[%s304] sm:$0xff]
        %v317 = vld [vmem:[%s304 + $0x8] sm:$0xff]
        %v318 = vld [vmem:[%s304 + $0x10] sm:$0xff]
        %v319 = vld [vmem:[%s304 + $0x18] sm:$0xff]
        %v320 = vpack.c.bf16 %v317, %v316
        %v321 = vpack.c.bf16 %v319, %v318
        %v322 = vld [vmem:[%s1] sm:$0xf]
        %v323 = vld [vmem:[%s1 + $0x4] sm:$0xf]
        %v324 = vld [vmem:[%s1 + $0x8] sm:$0xf]
        %v325 = vld [vmem:[%s2] sm:$0x1]
        %v327 = vlaneseq
        %v328 = vshrl.u32 %v327, 7
        %v329 = vsub.s32 0, %v328
        %v330 = vrot.slane %v325, %v329
        %v335 = vunpack.c.l.b16 %v322
        %v336 = vunpack.c.l.b16 %v323
        %v337 = vunpack.c.l.b16 %v324
        %v338 = vpack.c.b16 %v336, %v335
        %v339 = vpack.c.b16 %v337, %v337
        %vm341 = vcmask 195584
        %v343 = vsel %vm341, %v320, 0
        %v346 = vsel %vm341, %v321, 0
        %vm348 = vcmask 1043456
        %v350 = vsel %vm348, %v339, 0
        %352 = vmatprep.subr.bf16.mxu0 0
        %353 = vmatpush1.bf16.msra.mxu0 %v338
        %354 = vmatprep.subr.bf16.mxu0 0
        %355 = vmatpush1.bf16.msra.mxu0 %v350
        %356 = vmatprep.subr.bf16.mxu0 0
        %357 = vmatpush1.bf16.msra.mxu0 0
        %358 = vmatprep.subr.bf16.mxu0 0
        %359 = vmatpush1.bf16.msra.mxu0 0
        %360 = vmatprep.subr.bf16.mxu0 0
        %361 = vmatpush1.bf16.msra.mxu0 0
        %362 = vmatprep.subr.bf16.mxu0 0
        %363 = vmatpush1.bf16.msra.mxu0 0
        %364 = vmatprep.subr.bf16.mxu0 0
        %365 = vmatpush1.bf16.msra.mxu0 0
        %366 = vmatprep.subr.bf16.mxu0 0
        %367 = vmatpush1.bf16.msra.mxu0 0
        %368 = vmatprep.subr.bf16.mxu0 0
        %369 = vmatpush1.bf16.msra.mxu0 0
        %370 = vmatprep.subr.bf16.mxu0 0
        %371 = vmatpush1.bf16.msra.mxu0 0
        %372 = vmatprep.subr.bf16.mxu0 0
        %373 = vmatpush1.bf16.msra.mxu0 0
        %374 = vmatprep.subr.bf16.mxu0 0
        %375 = vmatpush1.bf16.msra.mxu0 0
        %376 = vmatprep.subr.bf16.mxu0 0
        %377 = vmatpush1.bf16.msra.mxu0 0
        %378 = vmatprep.subr.bf16.mxu0 0
        %379 = vmatpush1.bf16.msra.mxu0 0
        %380 = vmatprep.subr.bf16.mxu0 0
        %381 = vmatpush1.bf16.msra.mxu0 0
        %382 = vmatprep.subr.bf16.mxu0 0
        %383 = vmatpush1.bf16.msra.mxu0 0
        %384 = vmatprep.mubr.bf16.mxu0 0
        %385 = vmatmul.mubr.bf16.gmra.mrb[0].mxu0 %v343
        %v386 = vpop.f32.mrb[0].mxu0
        %v387 = vadd.f32 %v330, %v386
        %v388 = vpop.f32.mrb[0].mxu0
        %v389 = vpop.f32.mrb[0].mxu0
        %v390 = vadd.f32 %v330, %v389
        %v391 = vpop.f32.mrb[0].mxu0
        %392 = vmatprep.mubr.bf16.mxu0 0
        %393 = vmatmul.mubr.bf16.gmra.mrb[0].mxu0 %v346
        %v394 = vpop.f32.mrb[0].mxu0
        %v395 = vadd.f32 %v330, %v394
        %v396 = vpop.f32.mrb[0].mxu0
        %v397 = vpop.f32.mrb[0].mxu0
        %v398 = vadd.f32 %v330, %v397
        %v399 = vpop.f32.mrb[0].mxu0
        %400 = vdwg.mxu0
        %v401 = vmax.f32 %v387, 0.0
        %v402 = vmax.f32 %v390, 0.0
        %v403 = vmax.f32 %v395, 0.0
        %v404 = vmax.f32 %v398, 0.0
        %v405 = vpack.c.bf16 %v402, %v401
        %v406 = vpack.c.bf16 %v404, %v403
        %v407 = vld [vmem:[%s3] sm:$0xf]
        %v408 = vld [vmem:[%s3 + $0x4] sm:$0xf]
        %v409 = vld [vmem:[%s3 + $0x8] sm:$0xf]
        %v410 = vld [vmem:[%s3 + $0xc] sm:$0xf]
        %v411 = vld [vmem:[%s3 + $0x10] sm:$0xf]
        %v412 = vld [vmem:[%s3 + $0x14] sm:$0xf]
        %v413 = vld [vmem:[%s3 + $0x18] sm:$0xf]
        %v414 = vld [vmem:[%s3 + $0x1c] sm:$0xf]
        %v415 = vld [vmem:[%s3 + $0x20] sm:$0xf]
        %v416 = vld [vmem:[%s3 + $0x24] sm:$0xf]
        %v417 = vld [vmem:[%s3 + $0x28] sm:$0xf]
        %v418 = vld [vmem:[%s3 + $0x2c] sm:$0xf]
        %v419 = vld [vmem:[%s3 + $0x30] sm:$0xf]
        %v420 = vld [vmem:[%s3 + $0x34] sm:$0xf]
        %v421 = vld [vmem:[%s3 + $0x38] sm:$0xf]
        %v422 = vld [vmem:[%s3 + $0x3c] sm:$0xf]
        %v423 = vld [vmem:[%s4] sm:$0x1]
        %v425 = vlaneseq
        %v426 = vshrl.u32 %v425, 7
        %v427 = vsub.s32 0, %v426
        %v428 = vrot.slane %v423, %v427
        %v446 = vunpack.c.l.b16 %v407
        %v447 = vunpack.c.l.b16 %v408
        %v448 = vunpack.c.l.b16 %v409
        %v449 = vunpack.c.l.b16 %v410
        %v450 = vunpack.c.l.b16 %v411
        %v451 = vunpack.c.l.b16 %v412
        %v452 = vunpack.c.l.b16 %v413
        %v453 = vunpack.c.l.b16 %v414
        %v454 = vunpack.c.l.b16 %v415
        %v455 = vunpack.c.l.b16 %v416
        %v456 = vunpack.c.l.b16 %v417
        %v457 = vunpack.c.l.b16 %v418
        %v458 = vunpack.c.l.b16 %v419
        %v459 = vunpack.c.l.b16 %v420
        %v460 = vunpack.c.l.b16 %v421
        %v461 = vunpack.c.l.b16 %v422
        %v462 = vpack.c.b16 %v447, %v446
        %v463 = vpack.c.b16 %v449, %v448
        %v464 = vpack.c.b16 %v451, %v450
        %v465 = vpack.c.b16 %v453, %v452
        %v466 = vpack.c.b16 %v455, %v454
        %v467 = vpack.c.b16 %v457, %v456
        %v468 = vpack.c.b16 %v459, %v458
        %v469 = vpack.c.b16 %v461, %v460
        %478 = vmatprep.subr.bf16.mxu0 0
        %479 = vmatpush1.bf16.msra.mxu0 %v462
        %480 = vmatprep.subr.bf16.mxu0 0
        %481 = vmatpush1.bf16.msra.mxu0 %v463
        %482 = vmatprep.subr.bf16.mxu0 0
        %483 = vmatpush1.bf16.msra.mxu0 %v464
        %484 = vmatprep.subr.bf16.mxu0 0
        %485 = vmatpush1.bf16.msra.mxu0 %v465
        %486 = vmatprep.subr.bf16.mxu0 0
        %487 = vmatpush1.bf16.msra.mxu0 %v466
        %488 = vmatprep.subr.bf16.mxu0 0
        %489 = vmatpush1.bf16.msra.mxu0 %v467
        %490 = vmatprep.subr.bf16.mxu0 0
        %491 = vmatpush1.bf16.msra.mxu0 %v468
        %492 = vmatprep.subr.bf16.mxu0 0
        %493 = vmatpush1.bf16.msra.mxu0 %v469
        %494 = vmatprep.subr.bf16.mxu0 0
        %495 = vmatpush1.bf16.msra.mxu0 0
        %496 = vmatprep.subr.bf16.mxu0 0
        %497 = vmatpush1.bf16.msra.mxu0 0
        %498 = vmatprep.subr.bf16.mxu0 0
        %499 = vmatpush1.bf16.msra.mxu0 0
        %500 = vmatprep.subr.bf16.mxu0 0
        %501 = vmatpush1.bf16.msra.mxu0 0
        %502 = vmatprep.subr.bf16.mxu0 0
        %503 = vmatpush1.bf16.msra.mxu0 0
        %504 = vmatprep.subr.bf16.mxu0 0
        %505 = vmatpush1.bf16.msra.mxu0 0
        %506 = vmatprep.subr.bf16.mxu0 0
        %507 = vmatpush1.bf16.msra.mxu0 0
        %508 = vmatprep.subr.bf16.mxu0 0
        %509 = vmatpush1.bf16.msra.mxu0 0
        %510 = vmatprep.mubr.bf16.mxu0 0
        %511 = vmatmul.mubr.bf16.gmra.mrb[0].mxu0 %v405
        %v512 = vpop.f32.mrb[0].mxu0
        %v513 = vadd.f32 %v428, %v512
        %v514 = vpop.f32.mrb[0].mxu0
        %v515 = vpop.f32.mrb[0].mxu0
        %v516 = vadd.f32 %v428, %v515
        %v517 = vpop.f32.mrb[0].mxu0
        %518 = vmatprep.mubr.bf16.mxu0 0
        %519 = vmatmul.mubr.bf16.gmra.mrb[0].mxu0 %v406
        %v520 = vpop.f32.mrb[0].mxu0
        %v521 = vadd.f32 %v428, %v520
        %v522 = vpop.f32.mrb[0].mxu0
        %v523 = vpop.f32.mrb[0].mxu0
        %v524 = vadd.f32 %v428, %v523
        %v525 = vpop.f32.mrb[0].mxu0
        %526 = vdwg.mxu0
        %v527 = vmax.f32 %v513, 0.0
        %v528 = vmax.f32 %v516, 0.0
        %v529 = vmax.f32 %v521, 0.0
        %v530 = vmax.f32 %v524, 0.0
        %v531 = vpack.c.bf16 %v528, %v527
        %v532 = vpack.c.bf16 %v530, %v529
        %v533 = vld [vmem:[#allocation2] sm:$0xf]
        %v534 = vld [vmem:[#allocation2 + $0x4] sm:$0xf]
        %v535 = vld [vmem:[#allocation2 + $0x8] sm:$0xf]
        %v536 = vld [vmem:[#allocation2 + $0xc] sm:$0xf]
        %v537 = vld [vmem:[#allocation2 + $0x10] sm:$0xf]
        %v538 = vld [vmem:[#allocation2 + $0x14] sm:$0xf]
        %v539 = vld [vmem:[#allocation2 + $0x18] sm:$0xf]
        %v540 = vld [vmem:[#allocation2 + $0x1c] sm:$0xf]
        %v541 = vld [vmem:[#allocation2 + $0x20] sm:$0xf]
        %v542 = vld [vmem:[#allocation2 + $0x24] sm:$0xf]
        %v543 = vld [vmem:[#allocation2 + $0x28] sm:$0xf]
        %v544 = vld [vmem:[#allocation2 + $0x2c] sm:$0xf]
        %v545 = vld [vmem:[#allocation2 + $0x30] sm:$0xf]
        %v546 = vld [vmem:[#allocation2 + $0x34] sm:$0xf]
        %v547 = vld [vmem:[#allocation2 + $0x38] sm:$0xf]
        %v548 = vld [vmem:[#allocation2 + $0x3c] sm:$0xf]
        %v549 = vld [vmem:[%s6] sm:$0x1]
        %v551 = vlaneseq
        %v552 = vshrl.u32 %v551, 7
        %v553 = vsub.s32 0, %v552
        %v554 = vrot.slane %v549, %v553
        %v572 = vunpack.c.l.b16 %v533
        %v573 = vunpack.c.l.b16 %v534
        %v574 = vunpack.c.l.b16 %v535
        %v575 = vunpack.c.l.b16 %v536
        %v576 = vunpack.c.l.b16 %v537
        %v577 = vunpack.c.l.b16 %v538
        %v578 = vunpack.c.l.b16 %v539
        %v579 = vunpack.c.l.b16 %v540
        %v580 = vunpack.c.l.b16 %v541
        %v581 = vunpack.c.l.b16 %v542
        %v582 = vunpack.c.l.b16 %v543
        %v583 = vunpack.c.l.b16 %v544
        %v584 = vunpack.c.l.b16 %v545
        %v585 = vunpack.c.l.b16 %v546
        %v586 = vunpack.c.l.b16 %v547
        %v587 = vunpack.c.l.b16 %v548
        %v588 = vpack.c.b16 %v573, %v572
        %v589 = vpack.c.b16 %v575, %v574
        %v590 = vpack.c.b16 %v577, %v576
        %v591 = vpack.c.b16 %v579, %v578
        %v592 = vpack.c.b16 %v581, %v580
        %v593 = vpack.c.b16 %v583, %v582
        %v594 = vpack.c.b16 %v585, %v584
        %v595 = vpack.c.b16 %v587, %v586
        %604 = vmatprep.subr.bf16.mxu0 0
        %605 = vmatpush1.bf16.msra.mxu0 %v588
        %606 = vmatprep.subr.bf16.mxu0 0
        %607 = vmatpush1.bf16.msra.mxu0 %v589
        %608 = vmatprep.subr.bf16.mxu0 0
        %609 = vmatpush1.bf16.msra.mxu0 %v590
        %610 = vmatprep.subr.bf16.mxu0 0
        %611 = vmatpush1.bf16.msra.mxu0 %v591
        %612 = vmatprep.subr.bf16.mxu0 0
        %613 = vmatpush1.bf16.msra.mxu0 %v592
        %614 = vmatprep.subr.bf16.mxu0 0
        %615 = vmatpush1.bf16.msra.mxu0 %v593
        %616 = vmatprep.subr.bf16.mxu0 0
        %617 = vmatpush1.bf16.msra.mxu0 %v594
        %618 = vmatprep.subr.bf16.mxu0 0
        %619 = vmatpush1.bf16.msra.mxu0 %v595
        %620 = vmatprep.subr.bf16.mxu0 0
        %621 = vmatpush1.bf16.msra.mxu0 0
        %622 = vmatprep.subr.bf16.mxu0 0
        %623 = vmatpush1.bf16.msra.mxu0 0
        %624 = vmatprep.subr.bf16.mxu0 0
        %625 = vmatpush1.bf16.msra.mxu0 0
        %626 = vmatprep.subr.bf16.mxu0 0
        %627 = vmatpush1.bf16.msra.mxu0 0
        %628 = vmatprep.subr.bf16.mxu0 0
        %629 = vmatpush1.bf16.msra.mxu0 0
        %630 = vmatprep.subr.bf16.mxu0 0
        %631 = vmatpush1.bf16.msra.mxu0 0
        %632 = vmatprep.subr.bf16.mxu0 0
        %633 = vmatpush1.bf16.msra.mxu0 0
        %634 = vmatprep.subr.bf16.mxu0 0
        %635 = vmatpush1.bf16.msra.mxu0 0
        %636 = vmatprep.mubr.bf16.mxu0 0
        %637 = vmatmul.mubr.bf16.gmra.mrb[0].mxu0 %v531
        %v638 = vpop.f32.mrb[0].mxu0
        %v639 = vadd.f32 %v554, %v638
        %v640 = vpop.f32.mrb[0].mxu0
        %v641 = vpop.f32.mrb[0].mxu0
        %v642 = vadd.f32 %v554, %v641
        %v643 = vpop.f32.mrb[0].mxu0
        %644 = vmatprep.mubr.bf16.mxu0 0
        %645 = vmatmul.mubr.bf16.gmra.mrb[0].mxu0 %v532
        %v646 = vpop.f32.mrb[0].mxu0
        %v647 = vadd.f32 %v554, %v646
        %v648 = vpop.f32.mrb[0].mxu0
        %v649 = vpop.f32.mrb[0].mxu0
        %v650 = vadd.f32 %v554, %v649
        %v651 = vpop.f32.mrb[0].mxu0
        %652 = vdwg.mxu0
        %v653 = vpack.c.bf16 %v642, %v639
        %v654 = vpack.c.bf16 %v650, %v647
        %v657 = vunpack.c.l.b16 %v653
        %v658 = vunpack.c.h.b16 %v653
        %v659 = vunpack.c.l.b16 %v654
        %v660 = vunpack.c.h.b16 %v654
        %v661 = vpack.c.b16 %v657, %v657
        %v662 = vpack.c.b16 %v658, %v658
        %v663 = vpack.c.b16 %v659, %v659
        %v664 = vpack.c.b16 %v660, %v660
        %669 = vst [vmem:[%s295] sm:$0xf] %v661
        %670 = vst [vmem:[%s295 + $0x4] sm:$0xf] %v662
        %671 = vst [vmem:[%s295 + $0x8] sm:$0xf] %v663
        %672 = vst [vmem:[%s295 + $0xc] sm:$0xf] %v664
        %s673 = sand.u32 %s179, 1
        %s674 = sand.u32 %s179, 1
        %s675 = smul.addr %s674, 16
        %s676 = scalar_lea.vmem [#allocation4], %s675
        // Predicated region
        $region53: #{feed_forward_actor.1} parent=47 // pred_check
          %p677 = pneg %p189
        $region54: #{feed_forward_actor.1} parent=47 // pred_check_branch
          %679 = sbr.rel (%p677) target = $region56
        $region55: #{feed_forward_actor.1} parent=47 // pred_region
          %s680 = smul.u32 4, %s19
          %s681 = ssub.s32 5, %s680
          %p682 = scmp.lt.s32.totalorder %s681, 4
          %s683 = scalar_select %p682, %s681, 4
          %s684 = smul.u32 64, %s683
          %p685 = scmp.ne.s32.totalorder 0, %s684
          %s686 = smul.addr %s680, 4
          %s687 = scalar_lea.vmem %s7, %s686
          // Predicated region
          $region57: #{feed_forward_actor.1} parent=55 // pred_check
            %p688 = pneg %p685
          $region58: #{feed_forward_actor.1} parent=55 // pred_check_branch
            %690 = sbr.rel (%p688) target = $region60
          $region59: #{feed_forward_actor.1} parent=55 // pred_region
            // Predicated region
            $region61: #{feed_forward_actor.1} parent=59 // pred_check
              _
            $region62: #{feed_forward_actor.1} parent=59 // pred_check_branch
              %692 = sbr.rel target = $region64
            $region63: #{feed_forward_actor.1} parent=59 // pred_region
              // Predicated region
              $region83: #{feed_forward_actor.1} parent=63 // pred_check
                _
              $region84: #{feed_forward_actor.1} parent=63 // pred_check_branch
                %747 = sbr.rel (0) target = $region86
              $region85: #{feed_forward_actor.1} parent=63 // pred_region
                %s749 = sshrl.u32 %s683, 2
                // While loop
                $region87: #{feed_forward_actor.1} parent=85 // loop_pre_header
                  _
                $region88: #{feed_forward_actor.1} parent=85 // loop_header
                  %s751 = sphi 0, %s753
                  %p752 = scmp.ge.s32.totalorder %s751, %s749
                  %s756 = sphi 0, %s769
                  %s757 = sphi %s676, %s772
                  %s758 = sphi %s687, %s773
                $region89: #{feed_forward_actor.1} parent=85 // loop_header_branch
                  %755 = sbr.rel (%p752) target = $region93
                $region90: #{feed_forward_actor.1} parent=85 // loop_body
                  %v759 = vld [vmem:[%s757] sm:$0xf]
                  %760 = vst [vmem:[%s758] sm:$0xf] %v759
                  %v761 = vld [vmem:[%s757 + $0x4] sm:$0xf]
                  %762 = vst [vmem:[%s758 + $0x4] sm:$0xf] %v761
                  %v763 = vld [vmem:[%s757 + $0x8] sm:$0xf]
                  %764 = vst [vmem:[%s758 + $0x8] sm:$0xf] %v763
                  %v765 = vld [vmem:[%s757 + $0xc] sm:$0xf]
                  %766 = vst [vmem:[%s758 + $0xc] sm:$0xf] %v765
                  %s767 = sadd.s32 1, %s756
                  %p768 = scmp.ge.s32.totalorder %s767, %s749
                  %s769 = scalar_select %p768, 0, %s767
                  %s770 = smul.u32 %s769, 16
                  %s771 = smul.u32 %s769, 16
                  %s772 = scalar_lea.vmem %s676, %s770 [#allocation4]
                  %s773 = scalar_lea.vmem %s687, %s771
                $region91: #{feed_forward_actor.1} parent=85 // loop_footer
                  %s753 = sadd.s32 %s751, 1
                $region92: #{feed_forward_actor.1} parent=85 // loop_footer_branch
                  %750 = sbr.rel target = $region88
                $region93: #{feed_forward_actor.1} parent=85 // loop_exit
                  _
                %s774 = sshrl.u32 %s683, 2
                %s775 = sand.u32 %s683, 3
                %s776 = smul.u32 %s774, 4
                %s777 = smul.u32 4, %s776
                %s778 = scalar_lea.vmem %s676, %s777 [#allocation4]
                %s779 = smul.u32 4, %s776
                %s780 = scalar_lea.vmem %s687, %s779
                // While loop
                $region94: #{feed_forward_actor.1} parent=85 // loop_pre_header
                  _
                $region95: #{feed_forward_actor.1} parent=85 // loop_header
                  %s782 = sphi 0, %s784
                  %p783 = scmp.ge.s32.totalorder %s782, %s775
                  %s787 = sphi 0, %s794
                  %s788 = sphi %s778, %s797
                  %s789 = sphi %s780, %s798
                $region96: #{feed_forward_actor.1} parent=85 // loop_header_branch
                  %786 = sbr.rel (%p783) target = $region100
                $region97: #{feed_forward_actor.1} parent=85 // loop_body
                  %v790 = vld [vmem:[%s788] sm:$0xf]
                  %791 = vst [vmem:[%s789] sm:$0xf] %v790
                  %s792 = sadd.s32 1, %s787
                  %p793 = scmp.ge.s32.totalorder %s792, %s775
                  %s794 = scalar_select %p793, 0, %s792
                  %s795 = smul.u32 %s794, 4
                  %s796 = smul.u32 %s794, 4
                  %s797 = scalar_lea.vmem %s778, %s795 [#allocation4]
                  %s798 = scalar_lea.vmem %s780, %s796
                $region98: #{feed_forward_actor.1} parent=85 // loop_footer
                  %s784 = sadd.s32 %s782, 1
                $region99: #{feed_forward_actor.1} parent=85 // loop_footer_branch
                  %781 = sbr.rel target = $region95
                $region100: #{feed_forward_actor.1} parent=85 // loop_exit
                  _
              $region86: #{feed_forward_actor.1} parent=63 // pred_fallthru
                _
            $region64: #{feed_forward_actor.1} parent=59 // pred_fallthru
              _
            // Predicated region
            $region65: #{feed_forward_actor.1} parent=59 // pred_check
              _
            $region66: #{feed_forward_actor.1} parent=59 // pred_check_branch
              %694 = sbr.rel (0) target = $region68
            $region67: #{feed_forward_actor.1} parent=59 // pred_region
              %s696 = sshrl.u32 %s683, 2
              // While loop
              $region69: #{feed_forward_actor.1} parent=67 // loop_pre_header
                _
              $region70: #{feed_forward_actor.1} parent=67 // loop_header
                %s698 = sphi 0, %s700
                %p699 = scmp.ge.s32.totalorder %s698, %s696
                %s703 = sphi 0, %s716
                %s704 = sphi %s676, %s719
                %s705 = sphi %s687, %s720
              $region71: #{feed_forward_actor.1} parent=67 // loop_header_branch
                %702 = sbr.rel (%p699) target = $region75
              $region72: #{feed_forward_actor.1} parent=67 // loop_body
                %v706 = vld [vmem:[%s704] sm:$0xf]
                %707 = vst [vmem:[%s705] sm:$0xf] %v706
                %v708 = vld [vmem:[%s704 + $0x4] sm:$0xf]
                %709 = vst [vmem:[%s705 + $0x4] sm:$0xf] %v708
                %v710 = vld [vmem:[%s704 + $0x8] sm:$0xf]
                %711 = vst [vmem:[%s705 + $0x8] sm:$0xf] %v710
                %v712 = vld [vmem:[%s704 + $0xc] sm:$0xf]
                %713 = vst [vmem:[%s705 + $0xc] sm:$0xf] %v712
                %s714 = sadd.s32 1, %s703
                %p715 = scmp.ge.s32.totalorder %s714, %s696
                %s716 = scalar_select %p715, 0, %s714
                %s717 = smul.u32 %s716, 16
                %s718 = smul.u32 %s716, 16
                %s719 = scalar_lea.vmem %s676, %s717 [#allocation4]
                %s720 = scalar_lea.vmem %s687, %s718
              $region73: #{feed_forward_actor.1} parent=67 // loop_footer
                %s700 = sadd.s32 %s698, 1
              $region74: #{feed_forward_actor.1} parent=67 // loop_footer_branch
                %697 = sbr.rel target = $region70
              $region75: #{feed_forward_actor.1} parent=67 // loop_exit
                _
              %s721 = sshrl.u32 %s683, 2
              %s722 = sand.u32 %s683, 3
              %s723 = smul.u32 %s721, 4
              %s724 = smul.u32 4, %s723
              %s725 = scalar_lea.vmem %s676, %s724 [#allocation4]
              %s726 = smul.u32 4, %s723
              %s727 = scalar_lea.vmem %s687, %s726
              // While loop
              $region76: #{feed_forward_actor.1} parent=67 // loop_pre_header
                _
              $region77: #{feed_forward_actor.1} parent=67 // loop_header
                %s729 = sphi 0, %s731
                %p730 = scmp.ge.s32.totalorder %s729, %s722
                %s734 = sphi 0, %s741
                %s735 = sphi %s725, %s744
                %s736 = sphi %s727, %s745
              $region78: #{feed_forward_actor.1} parent=67 // loop_header_branch
                %733 = sbr.rel (%p730) target = $region82
              $region79: #{feed_forward_actor.1} parent=67 // loop_body
                %v737 = vld [vmem:[%s735] sm:$0xf]
                %738 = vst [vmem:[%s736] sm:$0xf] %v737
                %s739 = sadd.s32 1, %s734
                %p740 = scmp.ge.s32.totalorder %s739, %s722
                %s741 = scalar_select %p740, 0, %s739
                %s742 = smul.u32 %s741, 4
                %s743 = smul.u32 %s741, 4
                %s744 = scalar_lea.vmem %s725, %s742 [#allocation4]
                %s745 = scalar_lea.vmem %s727, %s743
              $region80: #{feed_forward_actor.1} parent=67 // loop_footer
                %s731 = sadd.s32 %s729, 1
              $region81: #{feed_forward_actor.1} parent=67 // loop_footer_branch
                %728 = sbr.rel target = $region77
              $region82: #{feed_forward_actor.1} parent=67 // loop_exit
                _
            $region68: #{feed_forward_actor.1} parent=59 // pred_fallthru
              _
          $region60: #{feed_forward_actor.1} parent=55 // pred_fallthru
            _
          %799 = vnop
        $region56: #{feed_forward_actor.1} parent=47 // pred_fallthru
          _
      $region48: #{feed_forward_actor.1} parent=5 // pred_fallthru
        _
      %p800 = scmp.le.s32.totalorder 2, %s14
      // Predicated region
      $region101: #{feed_forward_actor.1} parent=5 // pred_check
        %p801 = pneg %p800
      $region102: #{feed_forward_actor.1} parent=5 // pred_check_branch
        %803 = sbr.rel (%p801) target = $region104
      $region103: #{feed_forward_actor.1} parent=5 // pred_region
        %s804 = ssub.s32 %s14, 2
        // Predicated region
        $region105: #{feed_forward_actor.1} parent=103 // pred_check
          %p805 = pneg %p195
        $region106: #{feed_forward_actor.1} parent=103 // pred_check_branch
          %807 = sbr.rel (%p805) target = $region108
        $region107: #{feed_forward_actor.1} parent=103 // pred_region
          %s808 = sand.u32 %s180, 1
          %s809 = sand.u32 %s180, 1
          %s810 = smul.addr %s809, 16
          %s811 = scalar_lea.vmem [#allocation4], %s810
        $region108: #{feed_forward_actor.1} parent=103 // pred_fallthru
          _
      $region104: #{feed_forward_actor.1} parent=5 // pred_fallthru
        _
    $region6: #{feed_forward_actor.1} parent=1 // loop_footer
      %s18 = sadd.s32 1, %s14
    $region7: #{feed_forward_actor.1} parent=1 // loop_footer_branch
      %13 = sbr.rel target = $region3
    $region8: #{feed_forward_actor.1} parent=1 // loop_exit
      _
    %812 = vsyncpa [#allocation3], 1
    %s813 = scalar_lea.sflag [#allocation3], 1
    %814 = vsyncpa %s813, 1

</llo_original>
